<compile_context>
chip_gen: v5e
topology: v5e:2x2
jax: 0.10.0
libtpu: 0.0.40
codegen_flags: <defaults>
</compile_context>

<pallas_src>
import jax
import jax.numpy as jnp
from jax.experimental import pallas as pl
from jax.experimental.pallas import tpu as pltpu


def _cutmix_kernel(x0_ref, y0_ref, box_ref, apply_ref, perm_ref,   # scalar prefetch (SMEM)
                   row_ref, col_ref, img_ref, simg_ref,            # inputs (VMEM tiles)
                   out_ref):                                       # output (VMEM tile)
    # grid = (num_chunks, B): chunk is the outer axis so the row/col planes
    # (whose block index only depends on the chunk) are fetched once per chunk.
    b = pl.program_id(1)
    x0 = x0_ref[b]
    y0 = y0_ref[b]
    box = box_ref[b]
    do_apply = apply_ref[b] > 0
    del perm_ref  # consumed only by the target operand's index_map

    rows = row_ref[...]            # (S_chunk, LANE) int32: spatial row of each element
    cols = col_ref[...]            # (S_chunk, LANE) int32: spatial col of each element

    in_box = ((rows >= x0) & (rows < x0 + box) &
              (cols >= y0) & (cols < y0 + box))
    mask = (in_box & do_apply)[None]      # (1, S_chunk, LANE): broadcasts over sample dim

    out_ref[...] = jnp.where(mask, simg_ref[...], img_ref[...])


def _pick_layout(C, H, W):
    """Densest (S, LANE) flattening of one sample: lane-dense (128) if possible."""
    P = C * H * W
    lane = 128 if P % 128 == 0 else W
    return P // lane, lane


def _pick_chunk(S, lane, itemsize, budget_bytes=2 * 1024 * 1024):
    """Largest sublane chunk (divisor of S, multiple of 8) within the byte budget."""
    if S * lane * itemsize <= budget_bytes:
        return S
    max_chunk = max(8, budget_bytes // (lane * itemsize))
    c = (max_chunk // 8) * 8
    while c >= 8:
        if S % c == 0:
            return c
        c -= 8
    return S  # no aligned divisor: fall back to one full-size block


def _draw_params(key, B, H, W, *, min_cut_size, max_cut_size, batch_prob):
    """Per-sample RNG scalars (all shape (B,), int32) mirroring the torch loop."""
    k_perm, k_prob, k_box, k_x, k_y = jax.random.split(key, 5)
    perm = jax.random.permutation(k_perm, B).astype(jnp.int32)
    # torch.rand(1) > batch_prob  -> apply cutmix for this sample
    apply_flag = (jax.random.uniform(k_prob, (B,)) > batch_prob).astype(jnp.int32)
    # torch.randint(min, max+1); clamped so the box always fits the image.
    box = jax.random.randint(k_box, (B,), min_cut_size, max_cut_size + 1, dtype=jnp.int32)
    box = jnp.minimum(box, min(H, W))
    # torch.randint(0, H - box + 1) / (0, W - box + 1): per-sample dynamic bound.
    x0 = jax.random.randint(k_x, (B,), 0, H - box + 1, dtype=jnp.int32)
    y0 = jax.random.randint(k_y, (B,), 0, W - box + 1, dtype=jnp.int32)
    return perm, apply_flag, box, x0, y0


def _mix_labels(labels, perm, apply_flag, box, HW):
    lam = 1.0 - box.astype(jnp.float32) ** 2 / jnp.float32(HW)
    lam = jnp.where(apply_flag > 0, lam, jnp.float32(1.0))
    return (lam[:, None] * labels
            + (1.0 - lam)[:, None] * labels[perm]).astype(labels.dtype)


def cutmix_pallas(images, labels, key, *, min_cut_size, max_cut_size, batch_prob):
    """images: (B, C, H, W), labels: (B, NCLS)."""
    B, C, H, W = images.shape
    HW = H * W

    perm, apply_flag, box, x0, y0 = _draw_params(
        key, B, H, W, min_cut_size=min_cut_size, max_cut_size=max_cut_size,
        batch_prob=batch_prob)

    # ---- label mixing in plain JAX (tiny B x NCLS; XLA fuses it) ----
    out_labs = _mix_labels(labels, perm, apply_flag, box, HW)

    # ---- dense per-sample packing: sublane- and lane-dense (S, LANE) tiles ----
    S, LANE = _pick_layout(C, H, W)
    imgs_packed = images.reshape(B, S, LANE)

    # Precomputed row/col planes: removes per-element div/mod from the kernel.
    flat = jnp.arange(C * HW, dtype=jnp.int32)
    pix = flat % HW
    row_plane = (pix // W).reshape(S, LANE)
    col_plane = (pix % W).reshape(S, LANE)

    itemsize = jnp.dtype(images.dtype).itemsize
    S_chunk = _pick_chunk(S, LANE, itemsize)
    num_chunks = S // S_chunk

    grid_spec = pltpu.PrefetchScalarGridSpec(
        num_scalar_prefetch=5,
        # chunk outer / batch inner: the plane blocks (index depends only on the
        # chunk) repeat across the inner batch loop, so their DMA is elided.
        grid=(num_chunks, B),
        in_specs=[
            pl.BlockSpec((S_chunk, LANE), lambda c, b, *_: (c, 0)),        # row ids
            pl.BlockSpec((S_chunk, LANE), lambda c, b, *_: (c, 0)),        # col ids
            pl.BlockSpec((1, S_chunk, LANE), lambda c, b, *_: (b, c, 0)),  # source sample b
            # target sample perm[b]: gathered directly here — no separate
            # images[perm] materialization pass over HBM.
            pl.BlockSpec((1, S_chunk, LANE),
                         lambda c, b, x0r, y0r, boxr, apr, permr: (permr[b], c, 0)),
        ],
        out_specs=pl.BlockSpec((1, S_chunk, LANE), lambda c, b, *_: (b, c, 0)),
    )

    out_packed = pl.pallas_call(
        _cutmix_kernel,
        grid_spec=grid_spec,
        out_shape=jax.ShapeDtypeStruct((B, S, LANE), images.dtype),
        compiler_params=pltpu.CompilerParams(
            dimension_semantics=("parallel", "parallel"),
            vmem_limit_bytes=48 * 1024 * 1024),
    )(x0, y0, box, apply_flag, perm, row_plane, col_plane, imgs_packed, imgs_packed)

    return out_packed.reshape(B, C, H, W), out_labs


def _reference(images, labels, perm, apply_flag, box, x0, y0):
    """Pure-JAX reference using the same per-sample parameters."""
    B, C, H, W = images.shape
    rows = jnp.arange(H, dtype=jnp.int32)[None, None, :, None]
    cols = jnp.arange(W, dtype=jnp.int32)[None, None, None, :]
    x0b = x0[:, None, None, None]
    y0b = y0[:, None, None, None]
    bxb = box[:, None, None, None]
    in_box = (rows >= x0b) & (rows < x0b + bxb) & (cols >= y0b) & (cols < y0b + bxb)
    mask = in_box & (apply_flag > 0)[:, None, None, None]
    out_imgs = jnp.where(mask, images[perm], images)
    out_labs = _mix_labels(labels, perm, apply_flag, box, H * W)
    return out_imgs, out_labs


if __name__ == "__main__":
    key = jax.random.PRNGKey(0)
    k_img, k_lab, k_mix = jax.random.split(key, 3)

    B, C, H, W = 2, 4, 16, 16
    NCLS = 8

    images = jax.random.normal(k_img, (B, C, H, W), dtype=jnp.float32)
    labels = jax.nn.one_hot(
        jax.random.randint(k_lab, (B,), 0, NCLS), NCLS).astype(jnp.float32)

    # Module defaults (100, 100, 0.1) exceed a 16x16 image; use small cut sizes
    # consistent with the example spatial extent (the wrapper clamps regardless).
    min_cut, max_cut, bprob = 4, 8, 0.1

    out_imgs, out_labs = cutmix_pallas(
        images, labels, k_mix,
        min_cut_size=min_cut, max_cut_size=max_cut, batch_prob=bprob)
    jax.block_until_ready((out_imgs, out_labs))

    assert out_imgs.shape == (B, C, H, W)
    assert out_labs.shape == (B, NCLS)

    # Cross-check against a pure-JAX reference with identical RNG draws.
    perm, apply_flag, box, x0, y0 = _draw_params(
        k_mix, B, H, W, min_cut_size=min_cut, max_cut_size=max_cut,
        batch_prob=bprob)
    ref_imgs, ref_labs = _reference(images, labels, perm, apply_flag, box, x0, y0)
    assert jnp.allclose(out_imgs, ref_imgs)
    assert jnp.allclose(out_labs, ref_labs)

    print("KERNEL_OK")
</pallas_src>

<mosaic_0001>
module attributes {stable_mosaic.version = 11 : i64} {
  func.func @_cutmix_kernel(%arg0: i32, %arg1: i32, %arg2: memref<2xi32, #tpu.memory_space<smem>>, %arg3: memref<2xi32, #tpu.memory_space<smem>>, %arg4: memref<2xi32, #tpu.memory_space<smem>>, %arg5: memref<2xi32, #tpu.memory_space<smem>>, %arg6: memref<2xi32, #tpu.memory_space<smem>>, %arg7: memref<8x128xi32, #tpu.memory_space<vmem>>, %arg8: memref<8x128xi32, #tpu.memory_space<vmem>>, %arg9: memref<1x8x128xf32, #tpu.memory_space<vmem>>, %arg10: memref<1x8x128xf32, #tpu.memory_space<vmem>>, %arg11: memref<1x8x128xf32, #tpu.memory_space<vmem>>) attributes {dimension_semantics = [#tpu.dimension_semantics<parallel>, #tpu.dimension_semantics<parallel>], iteration_bounds = array<i64: 1, 2>, scalar_prefetch = 5 : i64, scratch_operands = 0 : i64, tpu.core_type = #tpu.core_type<tc>, window_params = [{transform_indices = @transform_0, window_bounds = array<i64: 8, 128>}, {transform_indices = @transform_1, window_bounds = array<i64: 8, 128>}, {transform_indices = @transform_2, window_bounds = array<i64: 1, 8, 128>}, {transform_indices = @transform_3, window_bounds = array<i64: 1, 8, 128>}, {transform_indices = @transform_4, window_bounds = array<i64: 1, 8, 128>}]} {
    %0 = arith.index_cast %arg1 : i32 to index
    %1 = memref.load %arg2[%0] : memref<2xi32, #tpu.memory_space<smem>>
    %2 = arith.index_cast %arg1 : i32 to index
    %3 = memref.load %arg3[%2] : memref<2xi32, #tpu.memory_space<smem>>
    %4 = arith.index_cast %arg1 : i32 to index
    %5 = memref.load %arg4[%4] : memref<2xi32, #tpu.memory_space<smem>>
    %6 = arith.index_cast %arg1 : i32 to index
    %7 = memref.load %arg5[%6] : memref<2xi32, #tpu.memory_space<smem>>
    %c0_i32 = arith.constant 0 : i32
    %8 = arith.cmpi sgt, %7, %c0_i32 : i32
    %c0 = arith.constant 0 : index
    %c0_0 = arith.constant 0 : index
    %9 = vector.load %arg7[%c0, %c0_0] : memref<8x128xi32, #tpu.memory_space<vmem>>, vector<8x128xi32>
    %c0_1 = arith.constant 0 : index
    %c0_2 = arith.constant 0 : index
    %10 = vector.load %arg8[%c0_1, %c0_2] : memref<8x128xi32, #tpu.memory_space<vmem>>, vector<8x128xi32>
    %11 = vector.broadcast %1 : i32 to vector<8x128xi32>
    %12 = arith.cmpi sge, %9, %11 : vector<8x128xi32>
    %13 = arith.addi %1, %5 : i32
    %14 = vector.broadcast %13 : i32 to vector<8x128xi32>
    %15 = arith.cmpi slt, %9, %14 : vector<8x128xi32>
    %16 = arith.andi %12, %15 : vector<8x128xi1>
    %17 = vector.broadcast %3 : i32 to vector<8x128xi32>
    %18 = arith.cmpi sge, %10, %17 : vector<8x128xi32>
    %19 = arith.andi %16, %18 : vector<8x128xi1>
    %20 = arith.addi %3, %5 : i32
    %21 = vector.broadcast %20 : i32 to vector<8x128xi32>
    %22 = arith.cmpi slt, %10, %21 : vector<8x128xi32>
    %23 = arith.andi %19, %22 : vector<8x128xi1>
    %24 = vector.broadcast %8 : i1 to vector<8x128xi1>
    %25 = arith.andi %23, %24 : vector<8x128xi1>
    %26 = vector.shape_cast %25 : vector<8x128xi1> to vector<1x8x128xi1>
    %c0_3 = arith.constant 0 : index
    %c0_4 = arith.constant 0 : index
    %c0_5 = arith.constant 0 : index
    %27 = vector.load %arg10[%c0_3, %c0_4, %c0_5] : memref<1x8x128xf32, #tpu.memory_space<vmem>>, vector<1x8x128xf32>
    %c0_6 = arith.constant 0 : index
    %c0_7 = arith.constant 0 : index
    %c0_8 = arith.constant 0 : index
    %28 = vector.load %arg9[%c0_6, %c0_7, %c0_8] : memref<1x8x128xf32, #tpu.memory_space<vmem>>, vector<1x8x128xf32>
    %29 = arith.select %26, %27, %28 : vector<1x8x128xi1>, vector<1x8x128xf32>
    %c0_9 = arith.constant 0 : index
    %c0_10 = arith.constant 0 : index
    %c0_11 = arith.constant 0 : index
    %30 = vector.load %arg11[%c0_9, %c0_10, %c0_11] : memref<1x8x128xf32, #tpu.memory_space<vmem>>, vector<1x8x128xf32>
    tpu.vector_store %arg11[%c0_9, %c0_10, %c0_11], %29 {strides = array<i32>} : memref<1x8x128xf32, #tpu.memory_space<vmem>>, vector<1x8x128xf32>,
    return
  }
  func.func @transform_0(%arg0: i32, %arg1: i32, %arg2: memref<2xi32, #tpu.memory_space<smem>>, %arg3: memref<2xi32, #tpu.memory_space<smem>>, %arg4: memref<2xi32, #tpu.memory_space<smem>>, %arg5: memref<2xi32, #tpu.memory_space<smem>>, %arg6: memref<2xi32, #tpu.memory_space<smem>>) -> (i32, i32) {
    %c0_i32 = arith.constant 0 : i32
    %c0_i32_0 = arith.constant 0 : i32
    return %arg0, %c0_i32 : i32, i32
  }
  func.func @transform_1(%arg0: i32, %arg1: i32, %arg2: memref<2xi32, #tpu.memory_space<smem>>, %arg3: memref<2xi32, #tpu.memory_space<smem>>, %arg4: memref<2xi32, #tpu.memory_space<smem>>, %arg5: memref<2xi32, #tpu.memory_space<smem>>, %arg6: memref<2xi32, #tpu.memory_space<smem>>) -> (i32, i32) {
    %c0_i32 = arith.constant 0 : i32
    %c0_i32_0 = arith.constant 0 : i32
    return %arg0, %c0_i32 : i32, i32
  }
  func.func @transform_2(%arg0: i32, %arg1: i32, %arg2: memref<2xi32, #tpu.memory_space<smem>>, %arg3: memref<2xi32, #tpu.memory_space<smem>>, %arg4: memref<2xi32, #tpu.memory_space<smem>>, %arg5: memref<2xi32, #tpu.memory_space<smem>>, %arg6: memref<2xi32, #tpu.memory_space<smem>>) -> (i32, i32, i32) {
    %c0_i32 = arith.constant 0 : i32
    %c0_i32_0 = arith.constant 0 : i32
    return %arg1, %arg0, %c0_i32 : i32, i32, i32
  }
  func.func @transform_3(%arg0: i32, %arg1: i32, %arg2: memref<2xi32, #tpu.memory_space<smem>>, %arg3: memref<2xi32, #tpu.memory_space<smem>>, %arg4: memref<2xi32, #tpu.memory_space<smem>>, %arg5: memref<2xi32, #tpu.memory_space<smem>>, %arg6: memref<2xi32, #tpu.memory_space<smem>>) -> (i32, i32, i32) {
    %0 = arith.index_cast %arg1 : i32 to index
    %1 = memref.load %arg6[%0] : memref<2xi32, #tpu.memory_space<smem>>
    %c0_i32 = arith.constant 0 : i32
    %c0_i32_0 = arith.constant 0 : i32
    return %1, %arg0, %c0_i32 : i32, i32, i32
  }
  func.func @transform_4(%arg0: i32, %arg1: i32, %arg2: memref<2xi32, #tpu.memory_space<smem>>, %arg3: memref<2xi32, #tpu.memory_space<smem>>, %arg4: memref<2xi32, #tpu.memory_space<smem>>, %arg5: memref<2xi32, #tpu.memory_space<smem>>, %arg6: memref<2xi32, #tpu.memory_space<smem>>) -> (i32, i32, i32) {
    %c0_i32 = arith.constant 0 : i32
    %c0_i32_0 = arith.constant 0 : i32
    return %arg1, %arg0, %c0_i32 : i32, i32, i32
  }
}

</mosaic_0001>

<llo_original>
// kernel: tpu_custom_call.1
$region0: #{tpu_custom_call.1}
  #allocation0 [shape = 'u32[]', space=smem, size = 0x4, offset = 0x4, fixed_abs, tag = 'smem constant byte address 0x4 - core index']
  #allocation1 [shape = 'u32[72,128]{1,0:T(1,128)}', space=vmem, size = 0x9000, scoped, tag = 'internal scratch']
  #allocation2 [shape = 's32[1]{0}', space=sflag, size = 0x4, scoped, tag = 'scoped memory for tpu_custom_call.1']
  #allocation3 [shape = 'u8[512]{0}', space=smem, size = 0x200, scoped, tag = 'prefetched SMEM operand 0']
  #allocation4 [shape = 'u8[512]{0}', space=smem, size = 0x200, scoped, tag = 'prefetched SMEM operand 1']
  #allocation5 [shape = 'u8[512]{0}', space=smem, size = 0x200, scoped, tag = 'prefetched SMEM operand 2']
  #allocation6 [shape = 'u8[512]{0}', space=smem, size = 0x200, scoped, tag = 'prefetched SMEM operand 3']
  #allocation7 [shape = 'u8[512]{0}', space=smem, size = 0x200, scoped, tag = 'prefetched SMEM operand 4']
  %s0 = inlined_call_operand.hbm [shape: s32[2], index: 0, kind: input, shape index: {}]
  %s1 = inlined_call_operand.hbm [shape: s32[2], index: 1, kind: input, shape index: {}]
  %s2 = inlined_call_operand.vmem [shape: s32[2], index: 2, kind: input, shape index: {}]
  %s3 = inlined_call_operand.vmem [shape: s32[2], index: 3, kind: input, shape index: {}]
  %s4 = inlined_call_operand.vmem [shape: s32[2], index: 4, kind: input, shape index: {}]
  %s5 = inlined_call_operand.hbm [shape: s32[8,128], index: 5, kind: input, shape index: {}]
  %s6 = inlined_call_operand.hbm [shape: s32[8,128], index: 6, kind: input, shape index: {}]
  %s7 = inlined_call_operand.hbm [shape: f32[2,8,128], index: 7, kind: input, shape index: {}]
  %s8 = inlined_call_operand.hbm [shape: f32[2,8,128], index: 8, kind: input, shape index: {}]
  %s9 = inlined_call_operand.hbm [shape: f32[2,8,128], index: 9, kind: output, shape index: {}]
  %s10 = sld [smem:[#allocation0]]
  $region65: #{tpu_custom_call.1} parent=0
    _
  %s12 = ssub.s32 1, %s10
  %s13 = scalar_select 0, %s12, %s10
  %s15 = sshll.u32 %s0, 4
  %s16 = int_to_ptr.hbm [resolvable:$true] %s15
  %18 = dma.hbm_to_smem %s16, 16, [#allocation3], [#allocation2]
  %s20 = sshll.u32 %s1, 4
  %s21 = int_to_ptr.hbm [resolvable:$true] %s20
  %23 = dma.hbm_to_smem %s21, 16, [#allocation4], [#allocation2]
  %s25 = sshll.u32 %s2, 4
  %s26 = int_to_ptr.vmem [resolvable:$true] %s25
  %28 = dma.vmem_to_smem %s26, 16, [#allocation5], [#allocation2]
  %s30 = sshll.u32 %s3, 4
  %s31 = int_to_ptr.vmem [resolvable:$true] %s30
  %33 = dma.vmem_to_smem %s31, 16, [#allocation6], [#allocation2]
  %s35 = sshll.u32 %s4, 4
  %s36 = int_to_ptr.vmem [resolvable:$true] %s35
  %38 = dma.vmem_to_smem %s36, 16, [#allocation7], [#allocation2]
  %40 = dma.done [#allocation2], 80
  %41 = sfence
  $region1: #{tpu_custom_call.1} parent=0
    #allocation8 [shape = 'u8[4096]{0}', space=vmem, size = 0x1000, scoped, tag = 'input window, operand 5, single buffered']
    #allocation9 [shape = 's32[2]{0}', space=sflag, size = 0x8, scoped, tag = 'scoped memory for tpu_custom_call.1']
    #allocation10 [shape = 's32[2]{0}', space=sflag, size = 0x8, scoped, tag = 'scoped memory for tpu_custom_call.1']
    #allocation11 [shape = 'u8[4096]{0}', space=vmem, size = 0x1000, scoped, tag = 'input window, operand 6, single buffered']
    #allocation12 [shape = 's32[1]{0}', space=sflag, size = 0x4, scoped, tag = 'scoped memory for tpu_custom_call.1']
    #allocation13 [shape = 'u8[8192]{0}', space=vmem, size = 0x2000, scoped, tag = 'input window, operand 7']
    #allocation14 [shape = 'u8[8192]{0}', space=vmem, size = 0x2000, scoped, tag = 'input window, operand 8']
    #allocation15 [shape = 'u8[8192]{0}', space=vmem, size = 0x2000, scoped, tag = 'output window, operand 0']
    %42 = vsyncpa [#allocation9], 0
    %43 = vsyncpa [#allocation12], 0
    %44 = vsyncpa [#allocation10], 0
    %s45 = scalar_lea.sflag [#allocation10], 1
    %46 = vsyncpa %s45, 0
    loop: start=0, step=1, limit=4
    $region2: #{tpu_custom_call.1} parent=1 // loop_pre_header
      _
    $region3: #{tpu_custom_call.1} parent=1 // loop_header
      %s48 = sphi 0, %s52
      %p49 = scmp.ge.s32.totalorder %s48, 4
      %s55 = sphi 0, %s67
      %s56 = sphi 0, %s63
      %s57 = sphi 0, %s55
      %s58 = sphi 0, %s56
      %s59 = sphi 0, %s57
      %s60 = sphi 0, %s58
      %s70 = sphi 0, %s72
      %s73 = sphi 0, %s70
      %s74 = sphi 0, %s73
      %s90 = sphi 0, %s74
      %s96 = sphi 0, %s98
      %s99 = sphi 0, %s96
      %s100 = sphi 0, %s99
      %s116 = sphi 0, %s100
      %s124 = sphi 0, %s126
      %s127 = sphi 0, %s124
      %s128 = sphi 0, %s127
      %s144 = sphi 0, %s128
      %s154 = sphi 0, %s156
      %s157 = sphi 0, %s154
      %s158 = sphi 0, %s157
      %s174 = sphi 0, %s158
      %s182 = sphi 0, %s184
      %s185 = sphi 0, %s182
      %s186 = sphi 0, %s185
      %s202 = sphi 0, %s186
    $region4: #{tpu_custom_call.1} parent=1 // loop_header_branch
      %51 = sbr.rel (%p49) target = $region8
    $region5: #{tpu_custom_call.1} parent=1 // loop_body
      %s53 = ssub.s32 %s48, 1
      %s54 = ssub.s32 %s48, 2
      %s61 = sadd.s32 1, %s56
      %p62 = scmp.ge.s32.totalorder %s61, 2
      %s63 = scalar_select %p62, 0, %s61
      %s64 = sadd.s32 1, %s55
      %s65 = scalar_select %p62, %s64, %s55
      %p66 = scmp.ge.s32.totalorder %s65, 1
      %s67 = scalar_select %p66, 0, %s65
      %s68 = ssub.s32 %s55, %s67
      %p69 = scmp.eq.s32.totalorder %s68, 0
      %s71 = sadd.s32 %s70, 1
      %s72 = scalar_select %p69, %s70, %s71
      %p75 = pneg %p69
      %p76 = scmp.eq.s32.totalorder %s48, 1
      %p77 = por %p75, %p76
      %p78 = scmp.ne.s32.totalorder %s70, %s73
      %p79 = scmp.eq.s32.totalorder %s48, 0
      %p80 = por %p78, %p79
      %p81 = scmp.ne.s32.totalorder %s70, %s73
      %p82 = scmp.eq.s32.totalorder %s53, 1
      %p83 = por %p81, %p82
      %p84 = scmp.ne.s32.totalorder %s73, %s74
      %p85 = scmp.eq.s32.totalorder %s53, 0
      %p86 = por %p84, %p85
      %p87 = scmp.ne.s32.totalorder %s73, %s74
      %p88 = scmp.eq.s32.totalorder %s54, 1
      %p89 = por %p87, %p88
      %p91 = scmp.ne.s32.totalorder %s74, %s90
      %p92 = scmp.eq.s32.totalorder %s54, 0
      %p93 = por %p91, %p92
      %s94 = ssub.s32 %s55, %s67
      %p95 = scmp.eq.s32.totalorder %s94, 0
      %s97 = sadd.s32 %s96, 1
      %s98 = scalar_select %p95, %s96, %s97
      %p101 = pneg %p95
      %p102 = scmp.eq.s32.totalorder %s48, 1
      %p103 = por %p101, %p102
      %p104 = scmp.ne.s32.totalorder %s96, %s99
      %p105 = scmp.eq.s32.totalorder %s48, 0
      %p106 = por %p104, %p105
      %p107 = scmp.ne.s32.totalorder %s96, %s99
      %p108 = scmp.eq.s32.totalorder %s53, 1
      %p109 = por %p107, %p108
      %p110 = scmp.ne.s32.totalorder %s99, %s100
      %p111 = scmp.eq.s32.totalorder %s53, 0
      %p112 = por %p110, %p111
      %p113 = scmp.ne.s32.totalorder %s99, %s100
      %p114 = scmp.eq.s32.totalorder %s54, 1
      %p115 = por %p113, %p114
      %p117 = scmp.ne.s32.totalorder %s100, %s116
      %p118 = scmp.eq.s32.totalorder %s54, 0
      %p119 = por %p117, %p118
      %s120 = ssub.s32 %s56, %s63
      %s121 = ssub.s32 %s55, %s67
      %s122 = sor.u32 %s120, %s121
      %p123 = scmp.eq.s32.totalorder %s122, 0
      %s125 = sadd.s32 %s124, 1
      %s126 = scalar_select %p123, %s124, %s125
      %p129 = pneg %p123
      %p130 = scmp.eq.s32.totalorder %s48, 1
      %p131 = por %p129, %p130
      %p132 = scmp.ne.s32.totalorder %s124, %s127
      %p133 = scmp.eq.s32.totalorder %s48, 0
      %p134 = por %p132, %p133
      %p135 = scmp.ne.s32.totalorder %s124, %s127
      %p136 = scmp.eq.s32.totalorder %s53, 1
      %p137 = por %p135, %p136
      %p138 = scmp.ne.s32.totalorder %s127, %s128
      %p139 = scmp.eq.s32.totalorder %s53, 0
      %p140 = por %p138, %p139
      %p141 = scmp.ne.s32.totalorder %s127, %s128
      %p142 = scmp.eq.s32.totalorder %s54, 1
      %p143 = por %p141, %p142
      %p145 = scmp.ne.s32.totalorder %s128, %s144
      %p146 = scmp.eq.s32.totalorder %s54, 0
      %p147 = por %p145, %p146
      %s148 = sld [smem:[#allocation7 + %s56]]
      %s149 = sld [smem:[#allocation7 + %s63]]
      %s150 = ssub.s32 %s148, %s149
      %s151 = ssub.s32 %s55, %s67
      %s152 = sor.u32 %s150, %s151
      %p153 = scmp.eq.s32.totalorder %s152, 0
      %s155 = sadd.s32 %s154, 1
      %s156 = scalar_select %p153, %s154, %s155
      %p159 = pneg %p153
      %p160 = scmp.eq.s32.totalorder %s48, 1
      %p161 = por %p159, %p160
      %p162 = scmp.ne.s32.totalorder %s154, %s157
      %p163 = scmp.eq.s32.totalorder %s48, 0
      %p164 = por %p162, %p163
      %p165 = scmp.ne.s32.totalorder %s154, %s157
      %p166 = scmp.eq.s32.totalorder %s53, 1
      %p167 = por %p165, %p166
      %p168 = scmp.ne.s32.totalorder %s157, %s158
      %p169 = scmp.eq.s32.totalorder %s53, 0
      %p170 = por %p168, %p169
      %p171 = scmp.ne.s32.totalorder %s157, %s158
      %p172 = scmp.eq.s32.totalorder %s54, 1
      %p173 = por %p171, %p172
      %p175 = scmp.ne.s32.totalorder %s158, %s174
      %p176 = scmp.eq.s32.totalorder %s54, 0
      %p177 = por %p175, %p176
      %s178 = ssub.s32 %s56, %s63
      %s179 = ssub.s32 %s55, %s67
      %s180 = sor.u32 %s178, %s179
      %p181 = scmp.eq.s32.totalorder %s180, 0
      %s183 = sadd.s32 %s182, 1
      %s184 = scalar_select %p181, %s182, %s183
      %p187 = pneg %p181
      %p188 = scmp.eq.s32.totalorder %s48, 1
      %p189 = por %p187, %p188
      %p190 = scmp.ne.s32.totalorder %s182, %s185
      %p191 = scmp.eq.s32.totalorder %s48, 0
      %p192 = por %p190, %p191
      %p193 = scmp.ne.s32.totalorder %s182, %s185
      %p194 = scmp.eq.s32.totalorder %s53, 1
      %p195 = por %p193, %p194
      %p196 = scmp.ne.s32.totalorder %s185, %s186
      %p197 = scmp.eq.s32.totalorder %s53, 0
      %p198 = por %p196, %p197
      %p199 = scmp.ne.s32.totalorder %s185, %s186
      %p200 = scmp.eq.s32.totalorder %s54, 1
      %p201 = por %p199, %p200
      %p203 = scmp.ne.s32.totalorder %s186, %s202
      %p204 = scmp.eq.s32.totalorder %s54, 0
      %p205 = por %p203, %p204
      %p206 = scmp.le.s32.totalorder 1, %s48
      %p207 = scmp.lt.s32.totalorder %s48, 3
      %p208 = pnand %p206, %p207
      %p209 = pneg %p208
      // Predicated region
      $region9: #{tpu_custom_call.1} parent=5 // pred_check
        _
      $region10: #{tpu_custom_call.1} parent=5 // pred_check_branch
        %211 = sbr.rel (%p208) target = $region12
      $region11: #{tpu_custom_call.1} parent=5 // pred_region
        %s212 = ssub.s32 %s48, 1
        // Predicated region
        $region13: #{tpu_custom_call.1} parent=11 // pred_check
          %p213 = pneg %p86
        $region14: #{tpu_custom_call.1} parent=11 // pred_check_branch
          %215 = sbr.rel (%p213) target = $region16
        $region15: #{tpu_custom_call.1} parent=11 // pred_region
          %217 = vsyncadd [#allocation9], 0
          %s218 = smul.addr %s57, 8
          %s219 = scalar_lea.hbm %s5, %s218
          %s221 = sshll.u32 %s219, 4
          %s222 = int_to_ptr.hbm [resolvable:$true] %s221
          %s223 = sshll.u32 [#allocation8], 4
          %s224 = int_to_ptr.vmem [resolvable:$true] %s223
          %226 = dma.hbm_to_vmem [thread:$0]  %s222, 128, %s224, [#allocation9]
        $region16: #{tpu_custom_call.1} parent=11 // pred_fallthru
          _
        // Predicated region
        $region17: #{tpu_custom_call.1} parent=11 // pred_check
          %p227 = pneg %p112
        $region18: #{tpu_custom_call.1} parent=11 // pred_check_branch
          %229 = sbr.rel (%p227) target = $region20
        $region19: #{tpu_custom_call.1} parent=11 // pred_region
          %231 = vsyncadd [#allocation12], 0
          %s232 = smul.addr %s57, 8
          %s233 = scalar_lea.hbm %s6, %s232
          %s235 = sshll.u32 %s233, 4
          %s236 = int_to_ptr.hbm [resolvable:$true] %s235
          %s237 = sshll.u32 [#allocation11], 4
          %s238 = int_to_ptr.vmem [resolvable:$true] %s237
          %240 = dma.hbm_to_vmem [thread:$0]  %s236, 128, %s238, [#allocation12]
        $region20: #{tpu_custom_call.1} parent=11 // pred_fallthru
          _
      $region12: #{tpu_custom_call.1} parent=5 // pred_fallthru
        _
      %p241 = scmp.lt.s32.totalorder %s48, 2
      // Predicated region
      $region21: #{tpu_custom_call.1} parent=5 // pred_check
        %p242 = pneg %p241
      $region22: #{tpu_custom_call.1} parent=5 // pred_check_branch
        %244 = sbr.rel (%p242) target = $region24
      $region23: #{tpu_custom_call.1} parent=5 // pred_region
        // Predicated region
        $region25: #{tpu_custom_call.1} parent=23 // pred_check
          %p245 = pneg %p134
        $region26: #{tpu_custom_call.1} parent=23 // pred_check_branch
          %247 = sbr.rel (%p245) target = $region28
        $region27: #{tpu_custom_call.1} parent=23 // pred_region
          %s248 = sand.u32 %s48, 1
          %s249 = scalar_lea.sflag [#allocation9], %s248
          %s250 = sand.u32 %s124, 1
          %s251 = smul.addr %s250, 8
          %s252 = scalar_lea.vmem [#allocation13], %s251
          %254 = vsyncadd %s249, 0
          %s255 = sadd.s32 %s55, %s56
          %s256 = smul.addr %s255, 8
          %s257 = scalar_lea.hbm %s7, %s256
          %s259 = sshll.u32 %s257, 4
          %s260 = int_to_ptr.hbm [resolvable:$true] %s259
          %s261 = sshll.u32 %s252, 4
          %s262 = int_to_ptr.vmem [resolvable:$true] %s261
          %264 = dma.hbm_to_vmem [thread:$0]  %s260, 128, %s262, %s249
        $region28: #{tpu_custom_call.1} parent=23 // pred_fallthru
          _
        // Predicated region
        $region29: #{tpu_custom_call.1} parent=23 // pred_check
          %p265 = pneg %p164
        $region30: #{tpu_custom_call.1} parent=23 // pred_check_branch
          %267 = sbr.rel (%p265) target = $region32
        $region31: #{tpu_custom_call.1} parent=23 // pred_region
          %s268 = sand.u32 %s48, 1
          %s269 = scalar_lea.sflag [#allocation9], %s268
          %s270 = sand.u32 %s154, 1
          %s271 = smul.addr %s270, 8
          %s272 = scalar_lea.vmem [#allocation14], %s271
          %s273 = sld [smem:[#allocation7 + %s56]]
          %275 = vsyncadd %s269, 0
          %s276 = sadd.s32 %s55, %s273
          %s277 = smul.addr %s276, 8
          %s278 = scalar_lea.hbm %s8, %s277
          %s280 = sshll.u32 %s278, 4
          %s281 = int_to_ptr.hbm [resolvable:$true] %s280
          %s282 = sshll.u32 %s272, 4
          %s283 = int_to_ptr.vmem [resolvable:$true] %s282
          %285 = dma.hbm_to_vmem [thread:$0]  %s281, 128, %s283, %s269
        $region32: #{tpu_custom_call.1} parent=23 // pred_fallthru
          _
      $region24: #{tpu_custom_call.1} parent=5 // pred_fallthru
        _
      %p286 = scmp.le.s32.totalorder 1, %s48
      %p287 = scmp.lt.s32.totalorder %s48, 3
      %p288 = pnand %p286, %p287
      %p289 = pneg %p288
      // Predicated region
      $region33: #{tpu_custom_call.1} parent=5 // pred_check
        _
      $region34: #{tpu_custom_call.1} parent=5 // pred_check_branch
        %291 = sbr.rel (%p288) target = $region36
      $region35: #{tpu_custom_call.1} parent=5 // pred_region
        %s292 = ssub.s32 %s48, 1
        // Predicated region
        $region37: #{tpu_custom_call.1} parent=35 // pred_check
          %p293 = pneg %p86
        $region38: #{tpu_custom_call.1} parent=35 // pred_check_branch
          %295 = sbr.rel (%p293) target = $region40
        $region39: #{tpu_custom_call.1} parent=35 // pred_region
          %297 = dma.done [#allocation9], 128
        $region40: #{tpu_custom_call.1} parent=35 // pred_fallthru
          _
        // Predicated region
        $region41: #{tpu_custom_call.1} parent=35 // pred_check
          %p298 = pneg %p112
        $region42: #{tpu_custom_call.1} parent=35 // pred_check_branch
          %300 = sbr.rel (%p298) target = $region44
        $region43: #{tpu_custom_call.1} parent=35 // pred_region
          %302 = dma.done [#allocation12], 128
        $region44: #{tpu_custom_call.1} parent=35 // pred_fallthru
          _
        %s303 = sand.u32 %s53, 1
        %s304 = scalar_lea.sflag [#allocation9], %s303
        %s305 = sand.u32 %s127, 1
        %s306 = smul.addr %s305, 8
        %s307 = scalar_lea.vmem [#allocation13], %s306
        // Predicated region
        $region45: #{tpu_custom_call.1} parent=35 // pred_check
          %p308 = pneg %p140
        $region46: #{tpu_custom_call.1} parent=35 // pred_check_branch
          %310 = sbr.rel (%p308) target = $region48
        $region47: #{tpu_custom_call.1} parent=35 // pred_region
          %312 = dma.done %s304, 128
        $region48: #{tpu_custom_call.1} parent=35 // pred_fallthru
          _
        %s313 = sand.u32 %s53, 1
        %s314 = scalar_lea.sflag [#allocation9], %s313
        %s315 = sand.u32 %s157, 1
        %s316 = smul.addr %s315, 8
        %s317 = scalar_lea.vmem [#allocation14], %s316
        // Predicated region
        $region49: #{tpu_custom_call.1} parent=35 // pred_check
          %p318 = pneg %p170
        $region50: #{tpu_custom_call.1} parent=35 // pred_check_branch
          %320 = sbr.rel (%p318) target = $region52
        $region51: #{tpu_custom_call.1} parent=35 // pred_region
          %322 = dma.done %s314, 128
        $region52: #{tpu_custom_call.1} parent=35 // pred_fallthru
          _
        %p323 = pneg %p86
        %p324 = pneg %p83
        %p325 = pneg %p112
        %p326 = pneg %p109
        %s327 = sand.u32 %s53, 1
        %s328 = scalar_lea.sflag [#allocation9], %s327
        %s329 = sand.u32 %s127, 1
        %s330 = smul.addr %s329, 8
        %s331 = scalar_lea.vmem [#allocation13], %s330
        %p332 = pneg %p140
        %p333 = pneg %p137
        %s334 = sand.u32 %s53, 1
        %s335 = scalar_lea.sflag [#allocation9], %s334
        %s336 = sand.u32 %s157, 1
        %s337 = smul.addr %s336, 8
        %s338 = scalar_lea.vmem [#allocation14], %s337
        %p339 = pneg %p170
        %p340 = pneg %p167
        %p341 = pneg %p198
        %p342 = pneg %p195
        %s343 = sand.u32 %s185, 1
        %s344 = scalar_lea.sflag [#allocation10], %s343
        %s345 = sand.u32 %s185, 1
        %s346 = smul.addr %s345, 8
        %s347 = scalar_lea.vmem [#allocation15], %s346
        %s348 = sld [smem:[#allocation7 + %s58]]
        %s349 = sld [smem:[#allocation3 + %s58]]
        %s350 = sld [smem:[#allocation4 + %s58]]
        %s351 = sld [smem:[#allocation5 + %s58]]
        %s352 = sld [smem:[#allocation6 + %s58]]
        %p353 = scmp.gt.s32.totalorder %s352, 0
        %v354 = vld [vmem:[#allocation8] sm:$0xff]
        %v355 = vld [vmem:[#allocation11] sm:$0xff]
        %v356 = vstv %s349
        %vm357 = vcmp.ge.s32.totalorder %v354, %v356
        %s358 = sadd.s32 %s349, %s351
        %v359 = vstv %s358
        %vm360 = vcmp.lt.s32.totalorder %v354, %v359
        %vm361 = vmand %vm357, %vm360
        %v362 = vstv %s350
        %vm363 = vcmp.ge.s32.totalorder %v355, %v362
        %vm364 = vmand %vm361, %vm363
        %s365 = sadd.s32 %s350, %s351
        %v366 = vstv %s365
        %vm367 = vcmp.lt.s32.totalorder %v355, %v366
        %vm368 = vmand %vm364, %vm367
        %s369 = scalar_select %p353, 1, 0
        %v370 = vstv %s369
        %vm371 = vcmp.eq.s32.totalorder %v370, 1
        %vm372 = vmand %vm368, %vm371
        %v373 = vld [vmem:[%s317] sm:$0xff]
        %v374 = vld [vmem:[%s307] sm:$0xff]
        %v375 = vsel %vm372, %v373, %v374
        %376 = vst [vmem:[%s347] sm:$0xff] %v375
        %s377 = sand.u32 %s185, 1
        %s378 = scalar_lea.sflag [#allocation10], %s377
        %s379 = sand.u32 %s185, 1
        %s380 = smul.addr %s379, 8
        %s381 = scalar_lea.vmem [#allocation15], %s380
        // Predicated region
        $region53: #{tpu_custom_call.1} parent=35 // pred_check
          %p382 = pneg %p195
        $region54: #{tpu_custom_call.1} parent=35 // pred_check_branch
          %384 = sbr.rel (%p382) target = $region56
        $region55: #{tpu_custom_call.1} parent=35 // pred_region
          %386 = vsyncadd %s378, 0
          %s387 = sadd.s32 %s57, %s58
          %s388 = smul.addr %s387, 8
          %s389 = scalar_lea.hbm %s9, %s388
          %s391 = sshll.u32 %s381, 4
          %s392 = int_to_ptr.vmem [resolvable:$true] %s391
          %s393 = sshll.u32 %s389, 4
          %s394 = int_to_ptr.hbm [resolvable:$true] %s393
          %396 = dma.vmem_to_hbm [thread:$0]  %s392, 128, %s394, %s378
        $region56: #{tpu_custom_call.1} parent=35 // pred_fallthru
          _
      $region36: #{tpu_custom_call.1} parent=5 // pred_fallthru
        _
      %p397 = scmp.le.s32.totalorder 2, %s48
      // Predicated region
      $region57: #{tpu_custom_call.1} parent=5 // pred_check
        %p398 = pneg %p397
      $region58: #{tpu_custom_call.1} parent=5 // pred_check_branch
        %400 = sbr.rel (%p398) target = $region60
      $region59: #{tpu_custom_call.1} parent=5 // pred_region
        %s401 = ssub.s32 %s48, 2
        // Predicated region
        $region61: #{tpu_custom_call.1} parent=59 // pred_check
          %p402 = pneg %p201
        $region62: #{tpu_custom_call.1} parent=59 // pred_check_branch
          %404 = sbr.rel (%p402) target = $region64
        $region63: #{tpu_custom_call.1} parent=59 // pred_region
          %s405 = sand.u32 %s186, 1
          %s406 = scalar_lea.sflag [#allocation10], %s405
          %s407 = sand.u32 %s186, 1
          %s408 = smul.addr %s407, 8
          %s409 = scalar_lea.vmem [#allocation15], %s408
          %411 = dma.done %s406, 128
        $region64: #{tpu_custom_call.1} parent=59 // pred_fallthru
          _
      $region60: #{tpu_custom_call.1} parent=5 // pred_fallthru
        _
    $region6: #{tpu_custom_call.1} parent=1 // loop_footer
      %s52 = sadd.s32 1, %s48
    $region7: #{tpu_custom_call.1} parent=1 // loop_footer_branch
      %47 = sbr.rel target = $region3
    $region8: #{tpu_custom_call.1} parent=1 // loop_exit
      _
    %412 = vsyncpa [#allocation9], 1
    %s413 = scalar_lea.sflag [#allocation9], 1
    %414 = vsyncpa %s413, 1
    %415 = vsyncpa [#allocation12], 1
    %416 = vsyncpa [#allocation10], 1
    %s417 = scalar_lea.sflag [#allocation10], 1
    %418 = vsyncpa %s417, 1

</llo_original>
